<compile_context>
chip_gen: v6e
topology: v6e:2x2x1
jax: 0.10.0
libtpu: 0.0.40
codegen_flags: <defaults>
</compile_context>

<pallas_src>
import jax
import jax.numpy as jnp
from jax.experimental import pallas as pl
from jax.experimental.pallas import tpu as pltpu


def _round_up(v: int, m: int) -> int:
    return ((v + m - 1) // m) * m


def _corner_kernel(x_ref, p_ref, o_ref):
    # x_ref, o_ref: (C, rows, W) top slab of one batch item (aliased memory).
    # p_ref:        (C, rows, W) zero-padded patch (resident across steps).
    o_ref[...] = x_ref[...] + p_ref[...]


def _make_full_kernel(rows: int, H: int):
    def kernel(x_ref, p_ref, o_ref):
        # x_ref, o_ref: (C, H, W) whole plane-stack of one batch item.
        # p_ref:        (C, rows, W) zero-padded patch.
        # Two disjoint, sublane-aligned stores; no redundant masked re-store.
        o_ref[:, :rows, :] = x_ref[:, :rows, :] + p_ref[...]
        if rows < H:
            o_ref[:, rows:, :] = x_ref[:, rows:, :]

    return kernel


def _pad_patch(patch: jax.Array, rows: int, W: int) -> jax.Array:
    C, psize, _ = patch.shape
    padded = jnp.zeros((C, rows, W), dtype=patch.dtype)
    return padded.at[:, :psize, :psize].set(patch)


def fixed_patch_prompter(x: jax.Array, patch: jax.Array, *, donate: bool = True) -> jax.Array:
    """x: (B, 3, H, W); patch: (3, psize, psize). Returns x + corner prompt.

    donate=True  -> output aliases x (x's buffer is consumed); only the patched
                    corner rows are moved through the kernel.
    donate=False -> x is preserved; the kernel copies the full image once.
    """
    B, C, H, W = x.shape
    pc, psize, psize2 = patch.shape
    assert pc == C == 3, "FixedPatchPrompter_image expects 3 channels"
    assert psize == psize2
    assert psize <= H and psize <= W

    # Sublane-aligned row count covering the patch (or the full height).
    rows = min(_round_up(psize, 8), H)
    patch_padded = _pad_patch(patch, rows, W)

    if donate:
        # Corner-only grid; the rest of the output is correct via aliasing.
        return pl.pallas_call(
            _corner_kernel,
            out_shape=jax.ShapeDtypeStruct((B, C, H, W), x.dtype),
            grid_spec=pl.GridSpec(
                grid=(B,),
                in_specs=[
                    pl.BlockSpec((None, C, rows, W), lambda b: (b, 0, 0, 0)),
                    # Constant block index -> patch DMA'd once, stays resident.
                    pl.BlockSpec((C, rows, W), lambda b: (0, 0, 0)),
                ],
                out_specs=pl.BlockSpec((None, C, rows, W), lambda b: (b, 0, 0, 0)),
            ),
            input_output_aliases={0: 0},
            compiler_params=pltpu.CompilerParams(
                dimension_semantics=("parallel",)
            ),
        )(x, patch_padded)

    # Non-donating fallback: single-pass full copy + patched top slab.
    return pl.pallas_call(
        _make_full_kernel(rows, H),
        out_shape=jax.ShapeDtypeStruct((B, C, H, W), x.dtype),
        grid_spec=pl.GridSpec(
            grid=(B,),
            in_specs=[
                pl.BlockSpec((None, C, H, W), lambda b: (b, 0, 0, 0)),
                pl.BlockSpec((C, rows, W), lambda b: (0, 0, 0)),
            ],
            out_specs=pl.BlockSpec((None, C, H, W), lambda b: (b, 0, 0, 0)),
        ),
        compiler_params=pltpu.CompilerParams(
            dimension_semantics=("parallel",)
        ),
    )(x, patch_padded)


if __name__ == "__main__":
    key = jax.random.PRNGKey(0)
    kx, kp = jax.random.split(key)

    B, C, H, W = 2, 3, 16, 16
    PSIZE = 8  # prompt_size

    x = jax.random.normal(kx, (B, C, H, W), dtype=jnp.float32)
    patch = jax.random.normal(kp, (C, PSIZE, PSIZE), dtype=jnp.float32)

    # Pure-JAX reference (computed first, before any buffer donation).
    prompt = jnp.zeros((B, C, H, W), dtype=jnp.float32)
    prompt = prompt.at[:, :, :PSIZE, :PSIZE].set(patch[None, :, :, :])
    ref = jax.block_until_ready(x + prompt)

    # Fallback (non-donating) path.
    out_full = jax.block_until_ready(fixed_patch_prompter(x, patch, donate=False))
    assert out_full.shape == (B, C, H, W) and out_full.dtype == x.dtype
    assert jnp.allclose(out_full, ref, atol=1e-6), "full-copy path mismatch"

    # Primary (aliased, corner-only) path.
    out_alias = jax.block_until_ready(fixed_patch_prompter(x, patch, donate=True))
    assert out_alias.shape == (B, C, H, W) and out_alias.dtype == x.dtype
    assert jnp.allclose(out_alias, ref, atol=1e-6), "aliased corner path mismatch"

    print("KERNEL_OK")
</pallas_src>

<mosaic_0001>
module attributes {stable_mosaic.version = 11 : i64} {
  func.func @kernel(%arg0: i32, %arg1: memref<1x3x16x16xf32, #tpu.memory_space<vmem>>, %arg2: memref<3x8x16xf32, #tpu.memory_space<vmem>>, %arg3: memref<1x3x16x16xf32, #tpu.memory_space<vmem>>) attributes {dimension_semantics = [#tpu.dimension_semantics<parallel>], iteration_bounds = array<i64: 2>, scalar_prefetch = 0 : i64, scratch_operands = 0 : i64, tpu.core_type = #tpu.core_type<tc>, window_params = [{transform_indices = @transform_0, window_bounds = array<i64: 1, 3, 16, 16>}, {pipeline_mode = #tpu.pipeline_mode<synchronous>, transform_indices = @transform_1, window_bounds = array<i64: 3, 8, 16>}, {transform_indices = @transform_2, window_bounds = array<i64: 1, 3, 16, 16>}]} {
    %c0 = arith.constant 0 : index
    %c0_0 = arith.constant 0 : index
    %c0_1 = arith.constant 0 : index
    %c0_2 = arith.constant 0 : index
    %0 = vector.load %arg1[%c0, %c0_0, %c0_1, %c0_2] : memref<1x3x16x16xf32, #tpu.memory_space<vmem>>, vector<1x3x8x16xf32>
    %1 = vector.shape_cast %0 : vector<1x3x8x16xf32> to vector<3x8x16xf32>
    %c0_3 = arith.constant 0 : index
    %c0_4 = arith.constant 0 : index
    %c0_5 = arith.constant 0 : index
    %2 = vector.load %arg2[%c0_3, %c0_4, %c0_5] : memref<3x8x16xf32, #tpu.memory_space<vmem>>, vector<3x8x16xf32>
    %3 = arith.addf %1, %2 : vector<3x8x16xf32>
    %c0_6 = arith.constant 0 : index
    %c0_7 = arith.constant 0 : index
    %c0_8 = arith.constant 0 : index
    %c0_9 = arith.constant 0 : index
    %4 = vector.load %arg3[%c0_6, %c0_7, %c0_8, %c0_9] : memref<1x3x16x16xf32, #tpu.memory_space<vmem>>, vector<1x3x8x16xf32>
    %5 = vector.shape_cast %4 : vector<1x3x8x16xf32> to vector<3x8x16xf32>
    %6 = vector.shape_cast %3 : vector<3x8x16xf32> to vector<1x3x8x16xf32>
    tpu.vector_store %arg3[%c0_6, %c0_7, %c0_8, %c0_9], %6 {strides = array<i32>} : memref<1x3x16x16xf32, #tpu.memory_space<vmem>>, vector<1x3x8x16xf32>,
    %c0_10 = arith.constant 0 : index
    %c0_11 = arith.constant 0 : index
    %c8 = arith.constant 8 : index
    %c0_12 = arith.constant 0 : index
    %7 = vector.load %arg1[%c0_10, %c0_11, %c8, %c0_12] : memref<1x3x16x16xf32, #tpu.memory_space<vmem>>, vector<1x3x8x16xf32>
    %8 = vector.shape_cast %7 : vector<1x3x8x16xf32> to vector<3x8x16xf32>
    %c0_13 = arith.constant 0 : index
    %c0_14 = arith.constant 0 : index
    %c8_15 = arith.constant 8 : index
    %c0_16 = arith.constant 0 : index
    %9 = vector.load %arg3[%c0_13, %c0_14, %c8_15, %c0_16] : memref<1x3x16x16xf32, #tpu.memory_space<vmem>>, vector<1x3x8x16xf32>
    %10 = vector.shape_cast %9 : vector<1x3x8x16xf32> to vector<3x8x16xf32>
    %11 = vector.shape_cast %8 : vector<3x8x16xf32> to vector<1x3x8x16xf32>
    tpu.vector_store %arg3[%c0_13, %c0_14, %c8_15, %c0_16], %11 {strides = array<i32>} : memref<1x3x16x16xf32, #tpu.memory_space<vmem>>, vector<1x3x8x16xf32>,
    return
  }
  func.func @transform_0(%arg0: i32) -> (i32, i32, i32, i32) {
    %c0_i32 = arith.constant 0 : i32
    %c0_i32_0 = arith.constant 0 : i32
    %c0_i32_1 = arith.constant 0 : i32
    %c0_i32_2 = arith.constant 0 : i32
    return %arg0, %c0_i32, %c0_i32_0, %c0_i32_1 : i32, i32, i32, i32
  }
  func.func @transform_1(%arg0: i32) -> (i32, i32, i32) {
    %c0_i32 = arith.constant 0 : i32
    %c0_i32_0 = arith.constant 0 : i32
    %c0_i32_1 = arith.constant 0 : i32
    %c0_i32_2 = arith.constant 0 : i32
    return %c0_i32, %c0_i32_0, %c0_i32_1 : i32, i32, i32
  }
  func.func @transform_2(%arg0: i32) -> (i32, i32, i32, i32) {
    %c0_i32 = arith.constant 0 : i32
    %c0_i32_0 = arith.constant 0 : i32
    %c0_i32_1 = arith.constant 0 : i32
    %c0_i32_2 = arith.constant 0 : i32
    return %arg0, %c0_i32, %c0_i32_0, %c0_i32_1 : i32, i32, i32, i32
  }
}

</mosaic_0001>

<llo_original>
// kernel: tpu_custom_call.1
$region0: #{tpu_custom_call.1}
  #allocation0 [shape = 'u32[]', space=smem, size = 0x4, offset = 0x4, fixed_abs, tag = 'smem constant byte address 0x4 - core index']
  #allocation1 [shape = 'u32[144,128]{1,0:T(1,128)}', space=vmem, size = 0x12000, scoped, tag = 'internal scratch']
  %s0 = inlined_call_operand.hbm [shape: f32[2,3,16,16], index: 0, kind: input, shape index: {}]
  %s1 = inlined_call_operand.hbm [shape: f32[3,8,16], index: 1, kind: input, shape index: {}]
  %s2 = inlined_call_operand.hbm [shape: f32[2,3,16,16], index: 2, kind: output, shape index: {}]
  %s3 = sld [smem:[#allocation0]]
  $region49: #{tpu_custom_call.1} parent=0
    _
  %s5 = ssub.s32 1, %s3
  %s6 = scalar_select 0, %s5, %s3
  $region1: #{tpu_custom_call.1} parent=0
    #allocation2 [shape = 'u8[49152]{0}', space=vmem, size = 0xc000, scoped, tag = 'input window, operand 0']
    #allocation3 [shape = 's32[2]{0}', space=sflag, size = 0x8, scoped, tag = 'scoped memory for tpu_custom_call.1']
    #allocation4 [shape = 's32[2]{0}', space=sflag, size = 0x8, scoped, tag = 'scoped memory for tpu_custom_call.1']
    #allocation5 [shape = 'u8[12288]{0}', space=vmem, size = 0x3000, scoped, tag = 'input window, operand 1, single buffered']
    #allocation6 [shape = 's32[1]{0}', space=sflag, size = 0x4, scoped, tag = 'scoped memory for tpu_custom_call.1']
    #allocation7 [shape = 'u8[49152]{0}', space=vmem, size = 0xc000, scoped, tag = 'output window, operand 0']
    %7 = vsyncpa [#allocation3], 0
    %s8 = scalar_lea.sflag [#allocation3], 1
    %9 = vsyncpa %s8, 0
    %10 = vsyncpa [#allocation6], 0
    %11 = vsyncpa [#allocation4], 0
    %s12 = scalar_lea.sflag [#allocation4], 1
    %13 = vsyncpa %s12, 0
    loop: start=0, step=1, limit=4
    $region2: #{tpu_custom_call.1} parent=1 // loop_pre_header
      _
    $region3: #{tpu_custom_call.1} parent=1 // loop_header
      %s15 = sphi 0, %s19
      %p16 = scmp.ge.s32.totalorder %s15, 4
      %s25 = sphi 0, %s27
      %s28 = sphi 0, %s25
      %s29 = sphi 0, %s28
      %s45 = sphi 0, %s29
      %s49 = sphi 0, %s49
      %s51 = sphi 0, %s49
      %s52 = sphi 0, %s51
      %s66 = sphi 0, %s52
      %s72 = sphi 0, %s74
      %s75 = sphi 0, %s72
      %s76 = sphi 0, %s75
      %s92 = sphi 0, %s76
    $region4: #{tpu_custom_call.1} parent=1 // loop_header_branch
      %18 = sbr.rel (%p16) target = $region8
    $region5: #{tpu_custom_call.1} parent=1 // loop_body
      %s20 = ssub.s32 %s15, 1
      %s21 = ssub.s32 %s15, 2
      %s22 = sadd.s32 %s15, 1
      %s23 = ssub.s32 %s15, %s22
      %p24 = scmp.eq.s32.totalorder %s23, 0
      %s26 = sadd.s32 %s25, 1
      %s27 = scalar_select %p24, %s25, %s26
      %p30 = pneg %p24
      %p31 = scmp.eq.s32.totalorder %s15, 1
      %p32 = por %p30, %p31
      %p33 = scmp.ne.s32.totalorder %s25, %s28
      %p34 = scmp.eq.s32.totalorder %s15, 0
      %p35 = por %p33, %p34
      %p36 = scmp.ne.s32.totalorder %s25, %s28
      %p37 = scmp.eq.s32.totalorder %s20, 1
      %p38 = por %p36, %p37
      %p39 = scmp.ne.s32.totalorder %s28, %s29
      %p40 = scmp.eq.s32.totalorder %s20, 0
      %p41 = por %p39, %p40
      %p42 = scmp.ne.s32.totalorder %s28, %s29
      %p43 = scmp.eq.s32.totalorder %s21, 1
      %p44 = por %p42, %p43
      %p46 = scmp.ne.s32.totalorder %s29, %s45
      %p47 = scmp.eq.s32.totalorder %s21, 0
      %p48 = por %p46, %p47
      %s50 = sadd.s32 %s49, 1
      %p53 = scmp.eq.s32.totalorder %s15, 1
      %p54 = scmp.ne.s32.totalorder %s49, %s51
      %p55 = scmp.eq.s32.totalorder %s15, 0
      %p56 = por %p54, %p55
      %p57 = scmp.ne.s32.totalorder %s49, %s51
      %p58 = scmp.eq.s32.totalorder %s20, 1
      %p59 = por %p57, %p58
      %p60 = scmp.ne.s32.totalorder %s51, %s52
      %p61 = scmp.eq.s32.totalorder %s20, 0
      %p62 = por %p60, %p61
      %p63 = scmp.ne.s32.totalorder %s51, %s52
      %p64 = scmp.eq.s32.totalorder %s21, 1
      %p65 = por %p63, %p64
      %p67 = scmp.ne.s32.totalorder %s52, %s66
      %p68 = scmp.eq.s32.totalorder %s21, 0
      %p69 = por %p67, %p68
      %s70 = ssub.s32 %s15, %s22
      %p71 = scmp.eq.s32.totalorder %s70, 0
      %s73 = sadd.s32 %s72, 1
      %s74 = scalar_select %p71, %s72, %s73
      %p77 = pneg %p71
      %p78 = scmp.eq.s32.totalorder %s15, 1
      %p79 = por %p77, %p78
      %p80 = scmp.ne.s32.totalorder %s72, %s75
      %p81 = scmp.eq.s32.totalorder %s15, 0
      %p82 = por %p80, %p81
      %p83 = scmp.ne.s32.totalorder %s72, %s75
      %p84 = scmp.eq.s32.totalorder %s20, 1
      %p85 = por %p83, %p84
      %p86 = scmp.ne.s32.totalorder %s75, %s76
      %p87 = scmp.eq.s32.totalorder %s20, 0
      %p88 = por %p86, %p87
      %p89 = scmp.ne.s32.totalorder %s75, %s76
      %p90 = scmp.eq.s32.totalorder %s21, 1
      %p91 = por %p89, %p90
      %p93 = scmp.ne.s32.totalorder %s76, %s92
      %p94 = scmp.eq.s32.totalorder %s21, 0
      %p95 = por %p93, %p94
      %p96 = scmp.le.s32.totalorder 1, %s15
      %p97 = scmp.lt.s32.totalorder %s15, 3
      %p98 = pnand %p96, %p97
      %p99 = pneg %p98
      // Predicated region
      $region9: #{tpu_custom_call.1} parent=5 // pred_check
        _
      $region10: #{tpu_custom_call.1} parent=5 // pred_check_branch
        %101 = sbr.rel (%p98) target = $region12
      $region11: #{tpu_custom_call.1} parent=5 // pred_region
        %s102 = ssub.s32 %s15, 1
        // Predicated region
        $region13: #{tpu_custom_call.1} parent=11 // pred_check
          %p103 = pneg %p62
        $region14: #{tpu_custom_call.1} parent=11 // pred_check_branch
          %105 = sbr.rel (%p103) target = $region16
        $region15: #{tpu_custom_call.1} parent=11 // pred_region
          %s107 = ssub.s32 384, 384
          %108 = vsyncadd [#allocation6], %s107
          %s109 = sshll.u32 [#allocation5], 4
          %s110 = int_to_ptr.vmem [resolvable:$true] %s109
          %115 = dma.hbm_to_vmem [thread:$0]  %s1, 384, %s110, [#allocation6], 128, 128, 8
        $region16: #{tpu_custom_call.1} parent=11 // pred_fallthru
          _
      $region12: #{tpu_custom_call.1} parent=5 // pred_fallthru
        _
      %p116 = scmp.lt.s32.totalorder %s15, 2
      // Predicated region
      $region17: #{tpu_custom_call.1} parent=5 // pred_check
        %p117 = pneg %p116
      $region18: #{tpu_custom_call.1} parent=5 // pred_check_branch
        %119 = sbr.rel (%p117) target = $region20
      $region19: #{tpu_custom_call.1} parent=5 // pred_region
        // Predicated region
        $region21: #{tpu_custom_call.1} parent=19 // pred_check
          %p120 = pneg %p35
        $region22: #{tpu_custom_call.1} parent=19 // pred_check_branch
          %122 = sbr.rel (%p120) target = $region24
        $region23: #{tpu_custom_call.1} parent=19 // pred_region
          %s123 = sand.u32 %s25, 1
          %s124 = scalar_lea.sflag [#allocation3], %s123
          %s125 = sand.u32 %s25, 1
          %s126 = smul.addr %s125, 48
          %s127 = scalar_lea.vmem [#allocation2], %s126
          %s129 = ssub.s32 768, 768
          %130 = vsyncadd %s124, %s129
          %s131 = smul.addr %s15, 6
          %s132 = smul.addr %s131, 128
          %s133 = scalar_lea.hbm %s0, %s132
          %s134 = sshll.u32 %s127, 4
          %s135 = int_to_ptr.vmem [resolvable:$true] %s134
          %140 = dma.hbm_to_vmem [thread:$0]  %s133, 768, %s135, %s124, 128, 128, 8
        $region24: #{tpu_custom_call.1} parent=19 // pred_fallthru
          _
      $region20: #{tpu_custom_call.1} parent=5 // pred_fallthru
        _
      %p141 = scmp.le.s32.totalorder 1, %s15
      %p142 = scmp.lt.s32.totalorder %s15, 3
      %p143 = pnand %p141, %p142
      %p144 = pneg %p143
      // Predicated region
      $region25: #{tpu_custom_call.1} parent=5 // pred_check
        _
      $region26: #{tpu_custom_call.1} parent=5 // pred_check_branch
        %146 = sbr.rel (%p143) target = $region28
      $region27: #{tpu_custom_call.1} parent=5 // pred_region
        %s147 = ssub.s32 %s15, 1
        %s148 = sand.u32 %s28, 1
        %s149 = scalar_lea.sflag [#allocation3], %s148
        %s150 = sand.u32 %s28, 1
        %s151 = smul.addr %s150, 48
        %s152 = scalar_lea.vmem [#allocation2], %s151
        // Predicated region
        $region29: #{tpu_custom_call.1} parent=27 // pred_check
          %p153 = pneg %p41
        $region30: #{tpu_custom_call.1} parent=27 // pred_check_branch
          %155 = sbr.rel (%p153) target = $region32
        $region31: #{tpu_custom_call.1} parent=27 // pred_region
          %156 = dma.done %s149, 768
        $region32: #{tpu_custom_call.1} parent=27 // pred_fallthru
          _
        // Predicated region
        $region33: #{tpu_custom_call.1} parent=27 // pred_check
          %p157 = pneg %p62
        $region34: #{tpu_custom_call.1} parent=27 // pred_check_branch
          %159 = sbr.rel (%p157) target = $region36
        $region35: #{tpu_custom_call.1} parent=27 // pred_region
          %160 = dma.done [#allocation6], 384
        $region36: #{tpu_custom_call.1} parent=27 // pred_fallthru
          _
        %s161 = sand.u32 %s28, 1
        %s162 = scalar_lea.sflag [#allocation3], %s161
        %s163 = sand.u32 %s28, 1
        %s164 = smul.addr %s163, 48
        %s165 = scalar_lea.vmem [#allocation2], %s164
        %p166 = pneg %p41
        %p167 = pneg %p38
        %p168 = pneg %p62
        %p169 = pneg %p59
        %p170 = pneg %p88
        %p171 = pneg %p85
        %s172 = sand.u32 %s75, 1
        %s173 = scalar_lea.sflag [#allocation4], %s172
        %s174 = sand.u32 %s75, 1
        %s175 = smul.addr %s174, 48
        %s176 = scalar_lea.vmem [#allocation7], %s175
        %v177 = vld [vmem:[%s152] sm:$0xff]
        %v178 = vld [vmem:[%s152 + $0x10] sm:$0xff]
        %v179 = vld [vmem:[%s152 + $0x20] sm:$0xff]
        %v180 = vld [vmem:[#allocation5] sm:$0xff]
        %v181 = vld [vmem:[#allocation5 + $0x8] sm:$0xff]
        %v182 = vld [vmem:[#allocation5 + $0x10] sm:$0xff]
        %v183 = vadd.f32 %v177, %v180
        %v184 = vadd.f32 %v178, %v181
        %v185 = vadd.f32 %v179, %v182
        %vm186 = vcmask 130048
        %187 = vst.msk [vmem:[%s176] sm:$0xff] %vm186, %v183
        %188 = vst.msk [vmem:[%s176 + $0x10] sm:$0xff] %vm186, %v184
        %189 = vst.msk [vmem:[%s176 + $0x20] sm:$0xff] %vm186, %v185
        %v190 = vld [vmem:[%s152 + $0x8] sm:$0xff]
        %v191 = vld [vmem:[%s152 + $0x18] sm:$0xff]
        %v192 = vld [vmem:[%s152 + $0x28] sm:$0xff]
        %193 = vst.msk [vmem:[%s176 + $0x8] sm:$0xff] %vm186, %v190
        %194 = vst.msk [vmem:[%s176 + $0x18] sm:$0xff] %vm186, %v191
        %195 = vst.msk [vmem:[%s176 + $0x28] sm:$0xff] %vm186, %v192
        %s196 = sand.u32 %s75, 1
        %s197 = scalar_lea.sflag [#allocation4], %s196
        %s198 = sand.u32 %s75, 1
        %s199 = smul.addr %s198, 48
        %s200 = scalar_lea.vmem [#allocation7], %s199
        // Predicated region
        $region37: #{tpu_custom_call.1} parent=27 // pred_check
          %p201 = pneg %p85
        $region38: #{tpu_custom_call.1} parent=27 // pred_check_branch
          %203 = sbr.rel (%p201) target = $region40
        $region39: #{tpu_custom_call.1} parent=27 // pred_region
          %s205 = ssub.s32 768, 768
          %206 = vsyncadd %s197, %s205
          %s207 = smul.addr %s20, 6
          %s208 = smul.addr %s207, 128
          %s209 = scalar_lea.hbm %s2, %s208
          %s210 = sshll.u32 %s200, 4
          %s211 = int_to_ptr.vmem [resolvable:$true] %s210
          %216 = dma.vmem_to_hbm [thread:$0]  %s211, 768, %s209, %s197, 128, 128, 8
        $region40: #{tpu_custom_call.1} parent=27 // pred_fallthru
          _
      $region28: #{tpu_custom_call.1} parent=5 // pred_fallthru
        _
      %p217 = scmp.le.s32.totalorder 2, %s15
      // Predicated region
      $region41: #{tpu_custom_call.1} parent=5 // pred_check
        %p218 = pneg %p217
      $region42: #{tpu_custom_call.1} parent=5 // pred_check_branch
        %220 = sbr.rel (%p218) target = $region44
      $region43: #{tpu_custom_call.1} parent=5 // pred_region
        %s221 = ssub.s32 %s15, 2
        // Predicated region
        $region45: #{tpu_custom_call.1} parent=43 // pred_check
          %p222 = pneg %p91
        $region46: #{tpu_custom_call.1} parent=43 // pred_check_branch
          %224 = sbr.rel (%p222) target = $region48
        $region47: #{tpu_custom_call.1} parent=43 // pred_region
          %s225 = sand.u32 %s76, 1
          %s226 = scalar_lea.sflag [#allocation4], %s225
          %s227 = sand.u32 %s76, 1
          %s228 = smul.addr %s227, 48
          %s229 = scalar_lea.vmem [#allocation7], %s228
          %230 = dma.done %s226, 768
        $region48: #{tpu_custom_call.1} parent=43 // pred_fallthru
          _
      $region44: #{tpu_custom_call.1} parent=5 // pred_fallthru
        _
    $region6: #{tpu_custom_call.1} parent=1 // loop_footer
      %s19 = sadd.s32 1, %s15
    $region7: #{tpu_custom_call.1} parent=1 // loop_footer_branch
      %14 = sbr.rel target = $region3
    $region8: #{tpu_custom_call.1} parent=1 // loop_exit
      _
    %231 = vsyncpa [#allocation3], 1
    %s232 = scalar_lea.sflag [#allocation3], 1
    %233 = vsyncpa %s232, 1
    %234 = vsyncpa [#allocation6], 1
    %235 = vsyncpa [#allocation4], 1
    %s236 = scalar_lea.sflag [#allocation4], 1
    %237 = vsyncpa %s236, 1

</llo_original>
